<compile_context>
chip_gen: v5e
topology: v5e:2x2
jax: 0.10.0
libtpu: 0.0.40
codegen_flags: <defaults>
</compile_context>

<pallas_src>
import functools

import jax
import jax.numpy as jnp
from jax.experimental import pallas as pl
from jax.experimental.pallas import tpu as pltpu

LANES = 128
SUBLANES = 8
MAX_BLOCK_ROWS = 4096   # 4096x128xf32 = 2 MiB/tile/input; 2 inputs x 2 buffers
                        # = 8 MiB + ~8 KiB accumulators -> fits every gen.
_NEG_FILL = -1e9        # sigmoid(_NEG_FILL) == 0 in f32, so pads are inert.


def _dice_kernel(o_ref, t_ref, loss_ref, inter_acc, denom_acc, *,
                 smooth, block_rows, valid_rows, need_mask):
    i = pl.program_id(0)

    @pl.when(i == 0)
    def _():
        inter_acc[...] = jnp.zeros_like(inter_acc)
        denom_acc[...] = jnp.zeros_like(denom_acc)

    # Load in native dtype, cast to f32 in-kernel (v5e has no bf16 VPU/EUP).
    out = jax.nn.sigmoid(o_ref[...].astype(jnp.float32))
    tgt = t_ref[...].astype(jnp.float32)

    if need_mask:
        # Last grid step overhangs the array: zero the out-of-range rows
        # (cheap VPU ops; only compiled in when the row axis is ragged).
        row = jax.lax.broadcasted_iota(jnp.int32, (block_rows, LANES), 0)
        mask = (i * block_rows + row) < valid_rows
        out = jnp.where(mask, out, 0.0)
        tgt = jnp.where(mask, tgt, 0.0)

    # (block_rows,128) -> (block_rows//8, 8, 128): trailing dims match a vreg
    # tile, so the reshape is free and the axis-0 sum is pure VPU adds.
    inter_p = (out * tgt).reshape(block_rows // SUBLANES, SUBLANES, LANES).sum(axis=0)
    denom_p = (out + tgt).reshape(block_rows // SUBLANES, SUBLANES, LANES).sum(axis=0)
    inter_acc[...] += inter_p
    denom_acc[...] += denom_p

    @pl.when(i == pl.num_programs(0) - 1)
    def _():
        # Two tiny (8,128) cross-lane reductions + scalar dice math, once.
        inter = jnp.sum(inter_acc[...])
        denom = jnp.sum(denom_acc[...]) + jnp.float32(smooth)
        dice = (2.0 * inter + jnp.float32(smooth)) / denom
        loss_ref[...] = jnp.full((1, 1), 1.0 - dice, dtype=jnp.float32)


def dice_loss(outputs, targets, smooth=1.0):
    """Pallas-TPU Dice loss: 1 - (2*sum(sig(o)*t)+s)/(sum(sig(o))+sum(t)+s)."""
    assert outputs.shape == targets.shape
    n = int(outputs.size)

    vreg_elems = SUBLANES * LANES                       # 1024
    n_pad = pl.cdiv(n, vreg_elems) * vreg_elems

    o_flat = jnp.ravel(outputs)
    t_flat = jnp.ravel(targets)
    if n_pad != n:
        # Sub-vreg remainder only (<1024 elems): pad logits so sigmoid == 0 and
        # targets with 0 -- padded lanes contribute nothing.  Skipped entirely
        # for vreg-multiple inputs (the common case), so no extra HBM copy.
        o_flat = jnp.pad(o_flat, (0, n_pad - n), constant_values=_NEG_FILL)
        t_flat = jnp.pad(t_flat, (0, n_pad - n))

    rows = n_pad // LANES                               # multiple of 8
    block_rows = min(rows, MAX_BLOCK_ROWS)              # multiple of 8
    grid_n = pl.cdiv(rows, block_rows)
    need_mask = (rows % block_rows) != 0                # ragged last tile?

    o2 = o_flat.reshape(rows, LANES)
    t2 = t_flat.reshape(rows, LANES)

    kernel = functools.partial(
        _dice_kernel, smooth=float(smooth), block_rows=block_rows,
        valid_rows=rows, need_mask=need_mask)

    bytes_accessed = n * (o2.dtype.itemsize + t2.dtype.itemsize) + 4
    cost = pl.CostEstimate(flops=5 * n, transcendentals=n,
                           bytes_accessed=bytes_accessed)

    loss = pl.pallas_call(
        kernel,
        out_shape=jax.ShapeDtypeStruct((1, 1), jnp.float32),
        grid_spec=pltpu.PrefetchScalarGridSpec(
            num_scalar_prefetch=0,
            grid=(grid_n,),
            in_specs=[
                pl.BlockSpec((block_rows, LANES), lambda i: (i, 0)),
                pl.BlockSpec((block_rows, LANES), lambda i: (i, 0)),
            ],
            out_specs=pl.BlockSpec((1, 1), lambda i: (0, 0)),
            scratch_shapes=[
                pltpu.VMEM((SUBLANES, LANES), jnp.float32),  # sum(sig(o)*t)
                pltpu.VMEM((SUBLANES, LANES), jnp.float32),  # sum(sig(o)+t)
            ],
        ),
        compiler_params=pltpu.CompilerParams(
            dimension_semantics=("arbitrary",),
            vmem_limit_bytes=32 * 1024 * 1024,  # explicit; ~8 MiB actually used
        ),
        cost_estimate=cost,
    )(o2, t2)
    return loss[0, 0]


def _dice_loss_ref(outputs, targets, smooth=1.0):
    o = jax.nn.sigmoid(outputs.astype(jnp.float32)).reshape(-1)
    t = targets.astype(jnp.float32).reshape(-1)
    inter = jnp.sum(o * t)
    dice = (2.0 * inter + smooth) / (jnp.sum(o) + jnp.sum(t) + smooth)
    return 1.0 - dice


if __name__ == "__main__":
    key = jax.random.PRNGKey(0)
    k1, k2 = jax.random.split(key)
    # NCHW logits and binary targets, as the PyTorch module expects.
    outputs = jax.random.normal(k1, (2, 4, 16, 16), dtype=jnp.float32)
    targets = jax.random.bernoulli(k2, 0.5, (2, 4, 16, 16)).astype(jnp.float32)

    loss = dice_loss(outputs, targets, smooth=1.0)
    loss = jax.block_until_ready(loss)

    ref = _dice_loss_ref(outputs, targets, smooth=1.0)
    assert jnp.allclose(loss, ref, atol=1e-5, rtol=1e-5), (loss, ref)
    print("KERNEL_OK")
</pallas_src>

<mosaic_0001>
module attributes {stable_mosaic.version = 11 : i64} {
  func.func @_dice_kernel(%arg0: i32, %arg1: memref<16x128xf32, #tpu.memory_space<vmem>>, %arg2: memref<16x128xf32, #tpu.memory_space<vmem>>, %arg3: memref<1x1xf32, #tpu.memory_space<vmem>>, %arg4: memref<8x128xf32, #tpu.memory_space<vmem>>, %arg5: memref<8x128xf32, #tpu.memory_space<vmem>>) attributes {dimension_semantics = [#tpu.dimension_semantics<arbitrary>], iteration_bounds = array<i64: 1>, scalar_prefetch = 0 : i64, scratch_operands = 2 : i64, tpu.core_type = #tpu.core_type<tc>, window_params = [{transform_indices = @transform_0, window_bounds = array<i64: 16, 128>}, {transform_indices = @transform_1, window_bounds = array<i64: 16, 128>}, {pipeline_mode = #tpu.pipeline_mode<synchronous>, transform_indices = @transform_2, window_bounds = array<i64: 1, 1>}]} {
    %c0_i32 = arith.constant 0 : i32
    %0 = arith.cmpi eq, %arg0, %c0_i32 : i32
    %1 = arith.extui %0 : i1 to i32
    %c0_i32_0 = arith.constant 0 : i32
    %2 = arith.cmpi ne, %1, %c0_i32_0 : i32
    scf.if %2 {
      %cst_16 = arith.constant 0.000000e+00 : f32
      %25 = vector.broadcast %cst_16 : f32 to vector<8x128xf32>
      %c0_17 = arith.constant 0 : index
      %c0_18 = arith.constant 0 : index
      %26 = vector.load %arg4[%c0_17, %c0_18] : memref<8x128xf32, #tpu.memory_space<vmem>>, vector<8x128xf32>
      tpu.vector_store %arg4[%c0_17, %c0_18], %25 {strides = array<i32>} : memref<8x128xf32, #tpu.memory_space<vmem>>, vector<8x128xf32>,
      %cst_19 = arith.constant 0.000000e+00 : f32
      %27 = vector.broadcast %cst_19 : f32 to vector<8x128xf32>
      %c0_20 = arith.constant 0 : index
      %c0_21 = arith.constant 0 : index
      %28 = vector.load %arg5[%c0_20, %c0_21] : memref<8x128xf32, #tpu.memory_space<vmem>>, vector<8x128xf32>
      tpu.vector_store %arg5[%c0_20, %c0_21], %27 {strides = array<i32>} : memref<8x128xf32, #tpu.memory_space<vmem>>, vector<8x128xf32>,
    } else {
    }
    %c0 = arith.constant 0 : index
    %c0_1 = arith.constant 0 : index
    %3 = vector.load %arg1[%c0, %c0_1] : memref<16x128xf32, #tpu.memory_space<vmem>>, vector<16x128xf32>
    %4 = arith.negf %3 : vector<16x128xf32>
    %5 = math.exp %4 : vector<16x128xf32>
    %cst = arith.constant 1.000000e+00 : f32
    %6 = vector.broadcast %cst : f32 to vector<16x128xf32>
    %7 = arith.addf %6, %5 : vector<16x128xf32>
    %8 = arith.divf %6, %7 : vector<16x128xf32>
    %c0_2 = arith.constant 0 : index
    %c0_3 = arith.constant 0 : index
    %9 = vector.load %arg2[%c0_2, %c0_3] : memref<16x128xf32, #tpu.memory_space<vmem>>, vector<16x128xf32>
    %10 = arith.mulf %8, %9 : vector<16x128xf32>
    %11 = vector.shape_cast %10 : vector<16x128xf32> to vector<2x8x128xf32>
    %cst_4 = arith.constant dense<0.000000e+00> : vector<8x128xf32>
    %12 = vector.multi_reduction <add>, %11, %cst_4 [0] : vector<2x8x128xf32> to vector<8x128xf32>
    %13 = arith.addf %8, %9 : vector<16x128xf32>
    %14 = vector.shape_cast %13 : vector<16x128xf32> to vector<2x8x128xf32>
    %cst_5 = arith.constant dense<0.000000e+00> : vector<8x128xf32>
    %15 = vector.multi_reduction <add>, %14, %cst_5 [0] : vector<2x8x128xf32> to vector<8x128xf32>
    %c0_6 = arith.constant 0 : index
    %c0_7 = arith.constant 0 : index
    %16 = vector.load %arg4[%c0_6, %c0_7] : memref<8x128xf32, #tpu.memory_space<vmem>>, vector<8x128xf32>
    %17 = arith.addf %16, %12 : vector<8x128xf32>
    %c0_8 = arith.constant 0 : index
    %c0_9 = arith.constant 0 : index
    %18 = vector.load %arg4[%c0_8, %c0_9] : memref<8x128xf32, #tpu.memory_space<vmem>>, vector<8x128xf32>
    tpu.vector_store %arg4[%c0_8, %c0_9], %17 {strides = array<i32>} : memref<8x128xf32, #tpu.memory_space<vmem>>, vector<8x128xf32>,
    %c0_10 = arith.constant 0 : index
    %c0_11 = arith.constant 0 : index
    %19 = vector.load %arg5[%c0_10, %c0_11] : memref<8x128xf32, #tpu.memory_space<vmem>>, vector<8x128xf32>
    %20 = arith.addf %19, %15 : vector<8x128xf32>
    %c0_12 = arith.constant 0 : index
    %c0_13 = arith.constant 0 : index
    %21 = vector.load %arg5[%c0_12, %c0_13] : memref<8x128xf32, #tpu.memory_space<vmem>>, vector<8x128xf32>
    tpu.vector_store %arg5[%c0_12, %c0_13], %20 {strides = array<i32>} : memref<8x128xf32, #tpu.memory_space<vmem>>, vector<8x128xf32>,
    %c0_i32_14 = arith.constant 0 : i32
    %22 = arith.cmpi eq, %arg0, %c0_i32_14 : i32
    %23 = arith.extui %22 : i1 to i32
    %c0_i32_15 = arith.constant 0 : i32
    %24 = arith.cmpi ne, %23, %c0_i32_15 : i32
    scf.if %24 {
      %c0_16 = arith.constant 0 : index
      %c0_17 = arith.constant 0 : index
      %25 = vector.load %arg4[%c0_16, %c0_17] : memref<8x128xf32, #tpu.memory_space<vmem>>, vector<8x128xf32>
      %26 = vector.shape_cast %25 : vector<8x128xf32> to vector<1x8x128xf32>
      %cst_18 = arith.constant dense<0.000000e+00> : vector<1xf32>
      %27 = vector.multi_reduction <add>, %26, %cst_18 [1, 2] : vector<1x8x128xf32> to vector<1xf32>
      %28 = vector.shape_cast %27 : vector<1xf32> to vector<1x1x1xf32>
      %29 = vector.extract %28[0, 0, 0] : f32 from vector<1x1x1xf32>
      %c0_19 = arith.constant 0 : index
      %c0_20 = arith.constant 0 : index
      %30 = vector.load %arg5[%c0_19, %c0_20] : memref<8x128xf32, #tpu.memory_space<vmem>>, vector<8x128xf32>
      %31 = vector.shape_cast %30 : vector<8x128xf32> to vector<1x8x128xf32>
      %cst_21 = arith.constant dense<0.000000e+00> : vector<1xf32>
      %32 = vector.multi_reduction <add>, %31, %cst_21 [1, 2] : vector<1x8x128xf32> to vector<1xf32>
      %33 = vector.shape_cast %32 : vector<1xf32> to vector<1x1x1xf32>
      %34 = vector.extract %33[0, 0, 0] : f32 from vector<1x1x1xf32>
      %cst_22 = arith.constant 1.000000e+00 : f32
      %35 = arith.addf %34, %cst_22 : f32
      %cst_23 = arith.constant 2.000000e+00 : f32
      %36 = arith.mulf %cst_23, %29 : f32
      %cst_24 = arith.constant 1.000000e+00 : f32
      %37 = arith.addf %36, %cst_24 : f32
      %38 = arith.divf %37, %35 : f32
      %cst_25 = arith.constant 1.000000e+00 : f32
      %39 = arith.subf %cst_25, %38 : f32
      %40 = vector.broadcast %39 : f32 to vector<1x1xf32>
      %c0_26 = arith.constant 0 : index
      %c0_27 = arith.constant 0 : index
      %41 = vector.load %arg3[%c0_26, %c0_27] : memref<1x1xf32, #tpu.memory_space<vmem>>, vector<1x1xf32>
      tpu.vector_store %arg3[%c0_26, %c0_27], %40 {strides = array<i32>} : memref<1x1xf32, #tpu.memory_space<vmem>>, vector<1x1xf32>,
    } else {
    }
    return
  }
  func.func @transform_0(%arg0: i32) -> (i32, i32) {
    %c0_i32 = arith.constant 0 : i32
    %c0_i32_0 = arith.constant 0 : i32
    return %arg0, %c0_i32 : i32, i32
  }
  func.func @transform_1(%arg0: i32) -> (i32, i32) {
    %c0_i32 = arith.constant 0 : i32
    %c0_i32_0 = arith.constant 0 : i32
    return %arg0, %c0_i32 : i32, i32
  }
  func.func @transform_2(%arg0: i32) -> (i32, i32) {
    %c0_i32 = arith.constant 0 : i32
    %c0_i32_0 = arith.constant 0 : i32
    %c0_i32_1 = arith.constant 0 : i32
    return %c0_i32, %c0_i32_0 : i32, i32
  }
}

</mosaic_0001>

<llo_original>
// kernel: tpu_custom_call.1
$region0: #{tpu_custom_call.1}
  #allocation0 [shape = 'u32[]', space=smem, size = 0x4, offset = 0x4, fixed_abs, tag = 'smem constant byte address 0x4 - core index']
  #allocation1 [shape = 'u32[72,128]{1,0:T(1,128)}', space=vmem, size = 0x9000, scoped, tag = 'internal scratch']
  #allocation2 [shape = 'f32[8,128]{1,0:T(8,128)}', space=vmem, size = 0x1000, scoped, tag = 'scratch operand']
  #allocation3 [shape = 'f32[8,128]{1,0:T(8,128)}', space=vmem, size = 0x1000, scoped, tag = 'scratch operand']
  %s0 = inlined_call_operand.hbm [shape: f32[16,128], index: 0, kind: input, shape index: {}]
  %s1 = inlined_call_operand.hbm [shape: f32[16,128], index: 1, kind: input, shape index: {}]
  %s2 = inlined_call_operand.hbm [shape: f32[1,1], index: 2, kind: output, shape index: {}]
  %s3 = sld [smem:[#allocation0]]
  $region34: #{tpu_custom_call.1} parent=0
    _
  %s5 = ssub.s32 1, %s3
  %s6 = scalar_select 0, %s5, %s3
  $region1: #{tpu_custom_call.1} parent=0
    #allocation4 [shape = 'u8[8192]{0}', space=vmem, size = 0x2000, scoped, tag = 'input window, operand 0, single buffered']
    #allocation5 [shape = 's32[1]{0}', space=sflag, size = 0x4, scoped, tag = 'scoped memory for tpu_custom_call.1']
    #allocation6 [shape = 's32[1]{0}', space=sflag, size = 0x4, scoped, tag = 'scoped memory for tpu_custom_call.1']
    #allocation7 [shape = 'u8[8192]{0}', space=vmem, size = 0x2000, scoped, tag = 'input window, operand 1, single buffered']
    #allocation8 [shape = 's32[1]{0}', space=sflag, size = 0x4, scoped, tag = 'scoped memory for tpu_custom_call.1']
    #allocation9 [shape = 'u8[512]{0}', space=vmem, size = 0x400, scoped, tag = 'output window, operand 0, single buffered']
    %7 = vsyncpa [#allocation5], 0
    %8 = vsyncpa [#allocation8], 0
    %9 = vsyncpa [#allocation6], 0
    // Predicated region
    $region2: #{tpu_custom_call.1} parent=1 // pred_check
      _
    $region3: #{tpu_custom_call.1} parent=1 // pred_check_branch
      %11 = sbr.rel (0) target = $region5
    $region4: #{tpu_custom_call.1} parent=1 // pred_region
      %13 = vsyncadd [#allocation5], 0
      %s14 = sshll.u32 %s0, 4
      %s15 = int_to_ptr.hbm [resolvable:$true] %s14
      %s16 = sshll.u32 [#allocation4], 4
      %s17 = int_to_ptr.vmem [resolvable:$true] %s16
      %22 = dma.hbm_to_vmem [thread:$0]  %s15, 256, %s17, [#allocation5], 128, 128, 8
    $region5: #{tpu_custom_call.1} parent=1 // pred_fallthru
      _
    // Predicated region
    $region6: #{tpu_custom_call.1} parent=1 // pred_check
      _
    $region7: #{tpu_custom_call.1} parent=1 // pred_check_branch
      %24 = sbr.rel (0) target = $region9
    $region8: #{tpu_custom_call.1} parent=1 // pred_region
      %26 = vsyncadd [#allocation8], 0
      %s27 = sshll.u32 %s1, 4
      %s28 = int_to_ptr.hbm [resolvable:$true] %s27
      %s29 = sshll.u32 [#allocation7], 4
      %s30 = int_to_ptr.vmem [resolvable:$true] %s29
      %35 = dma.hbm_to_vmem [thread:$0]  %s28, 256, %s30, [#allocation8], 128, 128, 8
    $region9: #{tpu_custom_call.1} parent=1 // pred_fallthru
      _
    // Predicated region
    $region10: #{tpu_custom_call.1} parent=1 // pred_check
      _
    $region11: #{tpu_custom_call.1} parent=1 // pred_check_branch
      %37 = sbr.rel (0) target = $region13
    $region12: #{tpu_custom_call.1} parent=1 // pred_region
      %39 = dma.done [#allocation5], 256
    $region13: #{tpu_custom_call.1} parent=1 // pred_fallthru
      _
    // Predicated region
    $region14: #{tpu_custom_call.1} parent=1 // pred_check
      _
    $region15: #{tpu_custom_call.1} parent=1 // pred_check_branch
      %41 = sbr.rel (0) target = $region17
    $region16: #{tpu_custom_call.1} parent=1 // pred_region
      %43 = dma.done [#allocation8], 256
    $region17: #{tpu_custom_call.1} parent=1 // pred_fallthru
      _
    %p44 = scmp.eq.s32.totalorder 0, 0
    // Predicated region
    $region18: #{tpu_custom_call.1} parent=1 // pred_check
      %p45 = pneg %p44
    $region19: #{tpu_custom_call.1} parent=1 // pred_check_branch
      %47 = sbr.rel (%p45) target = $region21
    $region20: #{tpu_custom_call.1} parent=1 // pred_region
      %48 = vst [vmem:[#allocation2] sm:$0xff] 0.0
      %49 = vst [vmem:[#allocation3] sm:$0xff] 0.0
    $region21: #{tpu_custom_call.1} parent=1 // pred_fallthru
      _
    %v50 = vld [vmem:[#allocation4] sm:$0xff]
    %v51 = vld [vmem:[#allocation4 + $0x8] sm:$0xff]
    %v52 = vxor.u32 %v50, 2147483648
    %v53 = vxor.u32 %v51, 2147483648
    %v54 = vmul.f32 %v52, 1.442695
    %v55 = vpow.pop %v54
    %v56 = vmul.f32 %v53, 1.442695
    %v57 = vpow.pop %v56
    %v58 = vadd.f32 %v55, 1.0
    %v59 = vadd.f32 %v57, 1.0
    %v60 = vrcp.pop %v58
    %v61 = vmul.f32 %v58, %v60
    %v62 = vsub.f32 1.0, %v61
    %v63 = vmul.f32 %v60, %v62
    %v64 = vadd.f32 %v60, %v63
    %vm65 = vweird.f32 %v58
    %vm66 = vweird.f32 %v60
    %vm67 = vmor %vm65, %vm66
    %v68 = vsel %vm67, %v60, %v64
    %v69 = vand.u32 2147483647, %v58
    %vm70 = vcmp.eq.f32.partialorder %v69, 8.507059e+37
    %v71 = vand.u32 %v58, 2147483648
    %v72 = vor.u32 1.1754944e-38, %v71
    %v73 = vsel %vm70, %v72, %v68
    %v74 = vmul.f32 1.0, %v73
    %v75 = vrcp.pop %v59
    %v76 = vmul.f32 %v59, %v75
    %v77 = vsub.f32 1.0, %v76
    %v78 = vmul.f32 %v75, %v77
    %v79 = vadd.f32 %v75, %v78
    %vm80 = vweird.f32 %v59
    %vm81 = vweird.f32 %v75
    %vm82 = vmor %vm80, %vm81
    %v83 = vsel %vm82, %v75, %v79
    %v84 = vand.u32 2147483647, %v59
    %vm85 = vcmp.eq.f32.partialorder %v84, 8.507059e+37
    %v86 = vand.u32 %v59, 2147483648
    %v87 = vor.u32 1.1754944e-38, %v86
    %v88 = vsel %vm85, %v87, %v83
    %v89 = vmul.f32 1.0, %v88
    %v90 = vld [vmem:[#allocation7] sm:$0xff]
    %v91 = vld [vmem:[#allocation7 + $0x8] sm:$0xff]
    %v92 = vmul.f32 %v74, %v90
    %v93 = vmul.f32 %v89, %v91
    %v94 = vadd.f32 %v92, %v93
    %v95 = vadd.f32 %v74, %v90
    %v96 = vadd.f32 %v89, %v91
    %v97 = vadd.f32 %v95, %v96
    %v98 = vld [vmem:[#allocation2] sm:$0xff]
    %v99 = vadd.f32 %v98, %v94
    %100 = vst [vmem:[#allocation2] sm:$0xff] %v99
    %v101 = vld [vmem:[#allocation3] sm:$0xff]
    %v102 = vadd.f32 %v101, %v97
    %103 = vst [vmem:[#allocation3] sm:$0xff] %v102
    // Predicated region
    $region22: #{tpu_custom_call.1} parent=1 // pred_check
      %p104 = pneg %p44
    $region23: #{tpu_custom_call.1} parent=1 // pred_check_branch
      %106 = sbr.rel (%p104) target = $region25
    $region24: #{tpu_custom_call.1} parent=1 // pred_region
      %v107 = vld [vmem:[#allocation2] sm:$0xff]
      %108 = vadd.xlane.f32.xlu0 %v107
      %v109 = vpop.xlane.xlu0 %108
      %v110 = vrot.slane %v109, 4
      %v111 = vadd.f32 %v109, %v110
      %v112 = vrot.slane %v111, 2
      %v113 = vadd.f32 %v111, %v112
      %v114 = vrot.slane %v113, 1
      %v115 = vadd.f32 %v113, %v114
      %s116 = vtos %v115
      %v117 = vld [vmem:[#allocation3] sm:$0xff]
      %118 = vadd.xlane.f32.xlu0 %v117
      %v119 = vpop.xlane.xlu0 %118
      %v120 = vrot.slane %v119, 4
      %v121 = vadd.f32 %v119, %v120
      %v122 = vrot.slane %v121, 2
      %v123 = vadd.f32 %v121, %v122
      %v124 = vrot.slane %v123, 1
      %v125 = vadd.f32 %v123, %v124
      %s126 = vtos %v125
      %s127 = sadd.f32 %s126, 1.0
      %s128 = smul.f32 %s116, 2.0
      %s129 = sadd.f32 %s128, 1.0
      %v130 = vstv %s127
      %v131 = vrcp.pop %v130
      %v132 = vmul.f32 %v130, %v131
      %v133 = vsub.f32 1.0, %v132
      %v134 = vmul.f32 %v131, %v133
      %v135 = vadd.f32 %v131, %v134
      %vm136 = vweird.f32 %v130
      %vm137 = vweird.f32 %v131
      %vm138 = vmor %vm136, %vm137
      %v139 = vsel %vm138, %v131, %v135
      %v140 = vand.u32 2147483647, %v130
      %vm141 = vcmp.eq.f32.partialorder %v140, 8.507059e+37
      %v142 = vand.u32 %v130, 2147483648
      %v143 = vor.u32 1.1754944e-38, %v142
      %v144 = vsel %vm141, %v143, %v139
      %s145 = vtos %v144
      %s146 = smul.f32 %s129, %s145
      %s147 = ssub.f32 1.0, %s146
      %v148 = vstv %s147
      %vm149 = vcmask 0
      %150 = vst.msk [vmem:[#allocation9] sm:$0x1] %vm149, %v148
    $region25: #{tpu_custom_call.1} parent=1 // pred_fallthru
      _
    // Predicated region
    $region26: #{tpu_custom_call.1} parent=1 // pred_check
      _
    $region27: #{tpu_custom_call.1} parent=1 // pred_check_branch
      %152 = sbr.rel (0) target = $region29
    $region28: #{tpu_custom_call.1} parent=1 // pred_region
      %154 = vsyncadd [#allocation6], 0
      %s156 = sshll.u32 [#allocation9], 4
      %s157 = int_to_ptr.vmem [resolvable:$true] %s156
      %s158 = sshll.u32 %s2, 4
      %s159 = int_to_ptr.hbm [resolvable:$true] %s158
      %161 = dma.vmem_to_hbm [thread:$0]  %s157, 16, %s159, [#allocation6]
    $region29: #{tpu_custom_call.1} parent=1 // pred_fallthru
      _
    // Predicated region
    $region30: #{tpu_custom_call.1} parent=1 // pred_check
      _
    $region31: #{tpu_custom_call.1} parent=1 // pred_check_branch
      %163 = sbr.rel (0) target = $region33
    $region32: #{tpu_custom_call.1} parent=1 // pred_region
      %165 = dma.done [#allocation6], 16
    $region33: #{tpu_custom_call.1} parent=1 // pred_fallthru
      _
    %166 = vsyncpa [#allocation5], 1
    %167 = vsyncpa [#allocation8], 1
    %168 = vsyncpa [#allocation6], 1

</llo_original>
